<compile_context>
chip_gen: v6e
topology: v6e:2x2x1
jax: 0.10.0
libtpu: 0.0.40
codegen_flags: <defaults>
</compile_context>

<pallas_src>
import functools

import jax
import jax.numpy as jnp
import numpy as np
from jax.experimental import pallas as pl
from jax.experimental.pallas import tpu as pltpu


def _round_up(x: int, m: int) -> int:
    return ((x + m - 1) // m) * m


def _apply_activation(h, activation: str):
    if activation == "relu":
        return jnp.maximum(h, 0.0)
    # elu, alpha = 1.0 (matches F.elu); exp sits in the EUP slot.
    return jnp.where(h > 0.0, h, jnp.exp(jnp.minimum(h, 0.0)) - 1.0)


def _fused_gnn_kernel(a_ref, x0_ref, w0_ref, wn_ref, b_ref, o_ref,
                      t_buf, *a_scratch,
                      activation: str, tm: int, num_layers: int,
                      a_resident: bool):
    """Fused multi-layer GCN stack.  grid = (layer l, row tile m), both 'arbitrary'.

      a_ref : resident: (N_pad, N_pad) bf16 raw HBM ref (pl.ANY, DMA'd once)
              streamed: (TM, N_pad)    bf16 VMEM row slab of A_hat for tile m
      x0_ref: (N_pad, D) bf16  padded input features (read once, at l==0,m==0)
      w0_ref: (1, D, D)  bf16  W_0 (only used for T_0 at the first grid step)
      wn_ref: (1, D, D)  bf16  W_{l+1} (rolled stack; dummy at l==last, unused)
      b_ref : (1, 1, D)  f32   bias of layer l
      o_ref : (TM, D)    f32   output row tile, written every layer (serial grid
                               order -> last layer's write is final in HBM)
      t_buf : (2, N_pad, D) bf16  ping-pong buffers for T_l = X_l @ W_l
      a_scratch (resident only): VMEM (N_pad, N_pad) bf16 + DMA semaphore
    """
    l = pl.program_id(0)
    m = pl.program_id(1)
    last = num_layers - 1
    first_step = jnp.logical_and(l == 0, m == 0)

    if a_resident:
        a_vmem, a_sem = a_scratch

        @pl.when(first_step)
        def _():
            # One-time A_hat HBM->VMEM DMA; overlaps with the T_0 matmul below.
            pltpu.make_async_copy(a_ref, a_vmem, a_sem).start()

    # First grid step only: T_0 = X_0 @ W_0 (the only full-graph feature
    # transform; subsequent T's are folded into the per-tile epilogue below).
    @pl.when(first_step)
    def _():
        t0 = jnp.dot(x0_ref[...], w0_ref[0],
                     preferred_element_type=jnp.float32)
        t_buf[0] = t0.astype(t_buf.dtype)

    if a_resident:
        @pl.when(first_step)
        def _():
            pltpu.make_async_copy(a_ref, a_vmem, a_sem).wait()

    row = pl.multiple_of(m * tm, tm)
    cur = l % 2

    if a_resident:
        a_rows = a_vmem[pl.ds(row, tm), :]
    else:
        a_rows = a_ref[...]

    # Aggregation for this row tile (MXU, f32 accumulation) + bias + activation.
    h = jnp.dot(a_rows, t_buf[cur], preferred_element_type=jnp.float32)
    h = _apply_activation(h + b_ref[0], activation)

    # Lane-dense (TM, D) output tile, written unconditionally every layer; the
    # serial grid order guarantees the last layer's write lands last in HBM.
    o_ref[...] = h.astype(o_ref.dtype)

    # Fold the next layer's feature transform into this tile's epilogue:
    #   T_{l+1}[rows m] = act(h) @ W_{l+1}
    # so the MXU never stalls on a per-layer "compute all of T" bubble.
    @pl.when(l != last)
    def _():
        t_next = jnp.dot(h.astype(t_buf.dtype), wn_ref[0],
                         preferred_element_type=jnp.float32)
        t_buf[1 - cur, pl.ds(row, tm), :] = t_next.astype(t_buf.dtype)


def build_normalized_adjacency(edge_index, num_nodes):
    """A_hat = D^{-1/2} (A + A^T + I) D^{-1/2} built in plain JAX (glue)."""
    src, dst = edge_index[0], edge_index[1]
    a = jnp.zeros((num_nodes, num_nodes), jnp.float32)
    a = a.at[src, dst].set(1.0)
    a = jnp.maximum(a, a.T)                        # symmetrize
    a = a + jnp.eye(num_nodes, dtype=jnp.float32)  # self loops
    deg = jnp.sum(a, axis=1)
    d_inv_sqrt = 1.0 / jnp.sqrt(jnp.maximum(deg, 1e-12))
    return a * d_inv_sqrt[:, None] * d_inv_sqrt[None, :]


class GNNEmbedderPallas:
    """JAX/Pallas port of GNNEmbedder with GCN-style gnn_{i} layers."""

    def __init__(self, in_features: int, hidden_features: int,
                 layer_count: int, activation: str, key):
        assert activation in ("relu", "elu"), f"Activation {activation} not defined"
        self.in_features = in_features
        self.out_features = hidden_features
        self.activation = activation
        self.layer_count = layer_count

        # Lane-dense padded feature width (zero-padded W/b columns keep the
        # padded output lanes exactly zero through relu/elu).
        self.feat_pad = max(_round_up(in_features, 128),
                            _round_up(hidden_features, 128))

        self.weights, self.biases = [], []   # unpadded f32 (reference / export)
        w_pad, b_pad = [], []
        fan_in = in_features
        for _ in range(layer_count):
            key, wk = jax.random.split(key)
            bound = 1.0 / np.sqrt(fan_in)
            w = jax.random.uniform(wk, (fan_in, hidden_features),
                                   jnp.float32, -bound, bound)
            b = jnp.zeros((1, hidden_features), jnp.float32)
            self.weights.append(w)
            self.biases.append(b)
            wp = jnp.zeros((self.feat_pad, self.feat_pad), jnp.float32)
            wp = wp.at[:fan_in, :hidden_features].set(w)
            bp = jnp.zeros((1, self.feat_pad), jnp.float32)
            bp = bp.at[:, :hidden_features].set(b)
            w_pad.append(wp)
            b_pad.append(bp)
            fan_in = hidden_features

        if layer_count > 0:
            self.w_stack = jnp.stack(w_pad).astype(jnp.bfloat16)       # (L, D, D)
            # Rolled stack so the "next layer" weight is indexed by plain l
            # (the l==last entry is a dummy that the kernel never uses).
            self.w_next_stack = jnp.roll(self.w_stack, shift=-1, axis=0)
            self.b_stack = jnp.stack(b_pad)                            # (L, 1, D) f32
        else:
            self.w_stack = self.w_next_stack = self.b_stack = None

    def __call__(self, x, edge_index, batch, *, force_stream_a: bool = False):
        if self.layer_count == 0:
            return x, batch

        n, f = x.shape
        d = self.feat_pad
        L = self.layer_count
        a_hat = build_normalized_adjacency(edge_index, n)
        n_pad = _round_up(n, 128)

        # Row-tile size: biggest of {512, 256, 128} dividing N_pad (amortizes
        # the ~0.35 us per-grid-step overhead).
        tm = 128
        for cand in (512, 256):
            if n_pad % cand == 0:
                tm = cand
                break

        # ---- generation-aware VMEM budgeting --------------------------------
        try:
            vmem_cap = int(pltpu.get_tpu_info().vmem_capacity_bytes)
        except Exception:
            vmem_cap = 64 * 1024 * 1024          # conservative (v7x physical)

        a_bytes = n_pad * n_pad * 2                       # resident A_hat (bf16)
        fixed = (2 * n_pad * d * 2                        # T ping-pong (bf16)
                 + 2 * n_pad * d * 2                      # X0 input (dbl-buffered)
                 + 2 * 2 * d * d * 2                      # W_0 / W_next blocks
                 + 2 * d * 4                              # bias block
                 + 2 * tm * d * 4)                        # output tile (dbl-buffered)
        headroom = 4 * 1024 * 1024

        a_resident = (not force_stream_a) and \
            (a_bytes + fixed + headroom) <= int(0.8 * vmem_cap)

        if a_resident:
            a_spec = pl.BlockSpec(memory_space=pl.ANY)    # raw HBM ref, DMA'd once
            scratch = [
                pltpu.VMEM((2, n_pad, d), jnp.bfloat16),   # T ping-pong
                pltpu.VMEM((n_pad, n_pad), jnp.bfloat16),  # resident A_hat
                pltpu.SemaphoreType.DMA(()),
            ]
            needed = a_bytes + fixed + headroom
        else:
            # Streamed fallback: A re-read from HBM every layer (memory-bound).
            tm = min(tm, 256)
            a_spec = pl.BlockSpec((tm, n_pad), lambda li, mi: (mi, 0))
            scratch = [pltpu.VMEM((2, n_pad, d), jnp.bfloat16)]
            needed = 2 * tm * n_pad * 2 + fixed + headroom

        m_tiles = n_pad // tm
        vmem_limit = int(min(vmem_cap - (2 << 20),
                             max(needed + (8 << 20), 48 << 20)))

        # bf16 MXU operands, zero-padded to lane/sublane-aligned shapes.
        a_pad = jnp.zeros((n_pad, n_pad), jnp.bfloat16)
        a_pad = a_pad.at[:n, :n].set(a_hat.astype(jnp.bfloat16))
        x_pad = jnp.zeros((n_pad, d), jnp.bfloat16)
        x_pad = x_pad.at[:n, :f].set(x.astype(jnp.bfloat16))

        kernel = functools.partial(_fused_gnn_kernel,
                                   activation=self.activation, tm=tm,
                                   num_layers=L, a_resident=a_resident)

        out = pl.pallas_call(
            kernel,
            out_shape=jax.ShapeDtypeStruct((n_pad, d), jnp.float32),
            grid_spec=pltpu.PrefetchScalarGridSpec(
                num_scalar_prefetch=0,
                grid=(L, m_tiles),
                in_specs=[
                    a_spec,                                             # A_hat
                    pl.BlockSpec((n_pad, d), lambda li, mi: (0, 0)),    # X_0
                    pl.BlockSpec((1, d, d), lambda li, mi: (0, 0, 0)),  # W_0
                    pl.BlockSpec((1, d, d), lambda li, mi: (li, 0, 0)), # W_{l+1}
                    pl.BlockSpec((1, 1, d), lambda li, mi: (li, 0, 0)), # b_l
                ],
                out_specs=pl.BlockSpec((tm, d), lambda li, mi: (mi, 0)),
                scratch_shapes=scratch,
            ),
            compiler_params=pltpu.CompilerParams(
                dimension_semantics=("arbitrary", "arbitrary"),
                vmem_limit_bytes=vmem_limit,
            ),
        )(a_pad, x_pad, self.w_stack, self.w_next_stack, self.b_stack)

        # Slice off padded rows/lanes before returning to downstream consumers.
        return out[:n, :self.out_features], batch


def _reference_forward_f32(model, x, edge_index, batch):
    """Pure-f32 JAX reference of the module semantics."""
    a_hat = build_normalized_adjacency(edge_index, x.shape[0])
    for i in range(model.layer_count):
        h = a_hat @ (x @ model.weights[i]) + model.biases[i]
        x = _apply_activation(h, model.activation)
    return x, batch


def _reference_forward_bf16(model, x, edge_index, batch):
    """Emulates the kernel's bf16-operand / f32-accumulate numerics."""
    a_bf = build_normalized_adjacency(edge_index, x.shape[0]).astype(jnp.bfloat16)
    x_bf = x.astype(jnp.bfloat16)
    h = x
    for i in range(model.layer_count):
        w_bf = model.weights[i].astype(jnp.bfloat16)
        t = jnp.dot(x_bf, w_bf, preferred_element_type=jnp.float32)
        h = jnp.dot(a_bf, t.astype(jnp.bfloat16),
                    preferred_element_type=jnp.float32) + model.biases[i]
        h = _apply_activation(h, model.activation)
        x_bf = h.astype(jnp.bfloat16)
    return h, batch


def _check(model, x, edge_index, batch, *, force_stream_a=False):
    out_x, out_batch = model(x, edge_index, batch, force_stream_a=force_stream_a)
    jax.block_until_ready(out_x)
    jax.block_until_ready(out_batch)
    assert out_x.shape == (x.shape[0], model.out_features)
    # Same bf16-operand / f32-accumulate recipe (loose enough for f32
    # accumulation-order / bf16 rounding-boundary differences).
    ref_x, ref_batch = _reference_forward_bf16(model, x, edge_index, batch)
    np.testing.assert_allclose(np.asarray(out_x), np.asarray(ref_x),
                               rtol=1e-2, atol=1e-2)
    # Module-semantics check vs. the pure-f32 forward (bf16 rounding tolerance).
    ref32_x, _ = _reference_forward_f32(model, x, edge_index, batch)
    np.testing.assert_allclose(np.asarray(out_x), np.asarray(ref32_x),
                               rtol=5e-2, atol=5e-2)
    np.testing.assert_array_equal(np.asarray(out_batch), np.asarray(ref_batch))


if __name__ == "__main__":
    key = jax.random.PRNGKey(0)

    # Small graph: single row tile, ELU, 2 layers (resident-A path).
    k_x, k_e, k_w, key = jax.random.split(key, 4)
    n, fin, hid, ne = 64, 32, 32, 128
    x = jax.random.normal(k_x, (n, fin), jnp.float32)
    edge_index = jax.random.randint(k_e, (2, ne), 0, n, dtype=jnp.int32)
    batch = jnp.zeros((n,), jnp.int32)
    model = GNNEmbedderPallas(fin, hid, layer_count=2, activation="elu", key=k_w)
    _check(model, x, edge_index, batch)

    # Slightly larger graph: 3 row tiles, ReLU, 3 layers; exercise both the
    # resident-A path and the streamed-A fallback.
    k_x2, k_e2, k_w2, key = jax.random.split(key, 4)
    n2, fin2, hid2, ne2 = 300, 48, 64, 600
    x2 = jax.random.normal(k_x2, (n2, fin2), jnp.float32)
    edge_index2 = jax.random.randint(k_e2, (2, ne2), 0, n2, dtype=jnp.int32)
    batch2 = jnp.zeros((n2,), jnp.int32)
    model2 = GNNEmbedderPallas(fin2, hid2, layer_count=3, activation="relu",
                               key=k_w2)
    _check(model2, x2, edge_index2, batch2)
    _check(model2, x2, edge_index2, batch2, force_stream_a=True)

    print("KERNEL_OK")
</pallas_src>

<mosaic_0001>
module attributes {stable_mosaic.version = 11 : i64} {
  func.func @_fused_gnn_kernel(%arg0: i32, %arg1: i32, %arg2: memref<128x128xbf16, #tpu.memory_space<any>>, %arg3: memref<128x128xbf16, #tpu.memory_space<vmem>>, %arg4: memref<1x128x128xbf16, #tpu.memory_space<vmem>>, %arg5: memref<1x128x128xbf16, #tpu.memory_space<vmem>>, %arg6: memref<1x1x128xf32, #tpu.memory_space<vmem>>, %arg7: memref<128x128xf32, #tpu.memory_space<vmem>>, %arg8: memref<2x128x128xbf16, #tpu.memory_space<vmem>>, %arg9: memref<128x128xbf16, #tpu.memory_space<vmem>>, %arg10: memref<!tpu.dma_semaphore, #tpu.memory_space<semaphore_mem>>) attributes {dimension_semantics = [#tpu.dimension_semantics<arbitrary>, #tpu.dimension_semantics<arbitrary>], iteration_bounds = array<i64: 2, 1>, scalar_prefetch = 0 : i64, scratch_operands = 3 : i64, tpu.core_type = #tpu.core_type<tc>, window_params = [{}, {pipeline_mode = #tpu.pipeline_mode<synchronous>, transform_indices = @transform_1, window_bounds = array<i64: 128, 128>}, {transform_indices = @transform_2, window_bounds = array<i64: 1, 128, 128>}, {transform_indices = @transform_3, window_bounds = array<i64: 1, 128, 128>}, {transform_indices = @transform_4, window_bounds = array<i64: 1, 1, 128>}, {transform_indices = @transform_5, window_bounds = array<i64: 128, 128>}]} {
    %c0_i32 = arith.constant 0 : i32
    %0 = arith.cmpi eq, %arg0, %c0_i32 : i32
    %c0_i32_0 = arith.constant 0 : i32
    %1 = arith.cmpi eq, %arg1, %c0_i32_0 : i32
    %2 = arith.andi %0, %1 : i1
    %3 = arith.extui %2 : i1 to i32
    %c0_i32_1 = arith.constant 0 : i32
    %4 = arith.cmpi ne, %3, %c0_i32_1 : i32
    scf.if %4 {
      tpu.enqueue_dma source(%arg2 : memref<128x128xbf16, #tpu.memory_space<any>>) target(%arg9 : memref<128x128xbf16, #tpu.memory_space<vmem>>) target_semaphore(%arg10 : memref<!tpu.dma_semaphore, #tpu.memory_space<semaphore_mem>>)
    } else {
    }
    %5 = arith.extui %2 : i1 to i32
    %c0_i32_2 = arith.constant 0 : i32
    %6 = arith.cmpi ne, %5, %c0_i32_2 : i32
    scf.if %6 {
      %c0_20 = arith.constant 0 : index
      %c0_21 = arith.constant 0 : index
      %43 = vector.load %arg3[%c0_20, %c0_21] : memref<128x128xbf16, #tpu.memory_space<vmem>>, vector<128x128xbf16>
      %c0_22 = arith.constant 0 : index
      %c0_23 = arith.constant 0 : index
      %c0_24 = arith.constant 0 : index
      %44 = vector.load %arg4[%c0_22, %c0_23, %c0_24] : memref<1x128x128xbf16, #tpu.memory_space<vmem>>, vector<1x128x128xbf16>
      %45 = vector.shape_cast %44 : vector<1x128x128xbf16> to vector<128x128xbf16>
      %cst_25 = arith.constant dense<0.000000e+00> : vector<128x128xf32>
      %46 = tpu.matmul %43, %45, %cst_25 {dimension_numbers = #tpu.dot_dimension_numbers<[1], [0], [0], [1], [0, 0, 1, 1], [], []>} : vector<128x128xbf16>, vector<128x128xbf16>, vector<128x128xf32> -> vector<128x128xf32>
      %47 = arith.truncf %46 : vector<128x128xf32> to vector<128x128xbf16>
      %c0_26 = arith.constant 0 : index
      %c0_27 = arith.constant 0 : index
      %c0_28 = arith.constant 0 : index
      %48 = vector.load %arg8[%c0_26, %c0_27, %c0_28] : memref<2x128x128xbf16, #tpu.memory_space<vmem>>, vector<1x128x128xbf16>
      %49 = vector.shape_cast %48 : vector<1x128x128xbf16> to vector<128x128xbf16>
      %50 = vector.shape_cast %47 : vector<128x128xbf16> to vector<1x128x128xbf16>
      tpu.vector_store %arg8[%c0_26, %c0_27, %c0_28], %50 {strides = array<i32>} : memref<2x128x128xbf16, #tpu.memory_space<vmem>>, vector<1x128x128xbf16>,
    } else {
    }
    %7 = arith.extui %2 : i1 to i32
    %c0_i32_3 = arith.constant 0 : i32
    %8 = arith.cmpi ne, %7, %c0_i32_3 : i32
    scf.if %8 {
      tpu.wait_dma2 semaphore(%arg10 : memref<!tpu.dma_semaphore, #tpu.memory_space<semaphore_mem>>) src(%arg2 : memref<128x128xbf16, #tpu.memory_space<any>>) dst(%arg9 : memref<128x128xbf16, #tpu.memory_space<vmem>>)
    } else {
    }
    %c128_i32 = arith.constant 128 : i32
    %9 = arith.muli %arg1, %c128_i32 : i32
    %10 = tpu.assume_multiple %9, 128 : i32
    %c2_i32 = arith.constant 2 : i32
    %c0_i32_4 = arith.constant 0 : i32
    %11 = arith.cmpi eq, %c2_i32, %c0_i32_4 : i32
    %c1_i32 = arith.constant 1 : i32
    %12 = arith.select %11, %c1_i32, %c2_i32 : i32
    %13 = arith.remsi %arg0, %12 : i32
    %c0_i32_5 = arith.constant 0 : i32
    %14 = arith.cmpi ne, %13, %c0_i32_5 : i32
    %c0_i32_6 = arith.constant 0 : i32
    %15 = arith.cmpi slt, %13, %c0_i32_6 : i32
    %c0_i32_7 = arith.constant 0 : i32
    %16 = arith.cmpi slt, %12, %c0_i32_7 : i32
    %17 = arith.xori %15, %16 : i1
    %18 = arith.andi %17, %14 : i1
    %19 = arith.addi %13, %12 : i32
    %20 = arith.select %18, %19, %13 : i32
    %21 = arith.index_cast %10 : i32 to index
    %c0 = arith.constant 0 : index
    %22 = vector.load %arg9[%21, %c0] : memref<128x128xbf16, #tpu.memory_space<vmem>>, vector<128x128xbf16>
    %23 = arith.index_cast %20 : i32 to index
    %c0_8 = arith.constant 0 : index
    %c0_9 = arith.constant 0 : index
    %24 = vector.load %arg8[%23, %c0_8, %c0_9] : memref<2x128x128xbf16, #tpu.memory_space<vmem>>, vector<1x128x128xbf16>
    %25 = vector.shape_cast %24 : vector<1x128x128xbf16> to vector<128x128xbf16>
    %cst = arith.constant dense<0.000000e+00> : vector<128x128xf32>
    %26 = tpu.matmul %22, %25, %cst {dimension_numbers = #tpu.dot_dimension_numbers<[1], [0], [0], [1], [0, 0, 1, 1], [], []>} : vector<128x128xbf16>, vector<128x128xbf16>, vector<128x128xf32> -> vector<128x128xf32>
    %c0_10 = arith.constant 0 : index
    %c0_11 = arith.constant 0 : index
    %c0_12 = arith.constant 0 : index
    %27 = vector.load %arg6[%c0_10, %c0_11, %c0_12] : memref<1x1x128xf32, #tpu.memory_space<vmem>>, vector<1x1x128xf32>
    %28 = vector.shape_cast %27 : vector<1x1x128xf32> to vector<1x128xf32>
    %29 = vector.broadcast %28 : vector<1x128xf32> to vector<128x128xf32>
    %30 = arith.addf %26, %29 : vector<128x128xf32>
    %cst_13 = arith.constant 0.000000e+00 : f32
    %31 = vector.broadcast %cst_13 : f32 to vector<128x128xf32>
    %32 = arith.cmpf ogt, %30, %31 : vector<128x128xf32>
    %cst_14 = arith.constant 0.000000e+00 : f32
    %33 = vector.broadcast %cst_14 : f32 to vector<128x128xf32>
    %34 = arith.minimumf %30, %33 : vector<128x128xf32>
    %35 = math.exp %34 : vector<128x128xf32>
    %cst_15 = arith.constant 1.000000e+00 : f32
    %36 = vector.broadcast %cst_15 : f32 to vector<128x128xf32>
    %37 = arith.subf %35, %36 : vector<128x128xf32>
    %38 = arith.select %32, %30, %37 : vector<128x128xi1>, vector<128x128xf32>
    %c0_16 = arith.constant 0 : index
    %c0_17 = arith.constant 0 : index
    %39 = vector.load %arg7[%c0_16, %c0_17] : memref<128x128xf32, #tpu.memory_space<vmem>>, vector<128x128xf32>
    tpu.vector_store %arg7[%c0_16, %c0_17], %38 {strides = array<i32>} : memref<128x128xf32, #tpu.memory_space<vmem>>, vector<128x128xf32>,
    %c1_i32_18 = arith.constant 1 : i32
    %40 = arith.cmpi ne, %arg0, %c1_i32_18 : i32
    %41 = arith.extui %40 : i1 to i32
    %c0_i32_19 = arith.constant 0 : i32
    %42 = arith.cmpi ne, %41, %c0_i32_19 : i32
    scf.if %42 {
      %43 = arith.truncf %38 : vector<128x128xf32> to vector<128x128xbf16>
      %c0_20 = arith.constant 0 : index
      %c0_21 = arith.constant 0 : index
      %c0_22 = arith.constant 0 : index
      %44 = vector.load %arg5[%c0_20, %c0_21, %c0_22] : memref<1x128x128xbf16, #tpu.memory_space<vmem>>, vector<1x128x128xbf16>
      %45 = vector.shape_cast %44 : vector<1x128x128xbf16> to vector<128x128xbf16>
      %cst_23 = arith.constant dense<0.000000e+00> : vector<128x128xf32>
      %46 = tpu.matmul %43, %45, %cst_23 {dimension_numbers = #tpu.dot_dimension_numbers<[1], [0], [0], [1], [0, 0, 1, 1], [], []>} : vector<128x128xbf16>, vector<128x128xbf16>, vector<128x128xf32> -> vector<128x128xf32>
      %47 = arith.truncf %46 : vector<128x128xf32> to vector<128x128xbf16>
      %c1_i32_24 = arith.constant 1 : i32
      %48 = arith.subi %c1_i32_24, %20 : i32
      %49 = arith.index_cast %48 : i32 to index
      %50 = arith.index_cast %10 : i32 to index
      %c0_25 = arith.constant 0 : index
      %51 = vector.load %arg8[%49, %50, %c0_25] : memref<2x128x128xbf16, #tpu.memory_space<vmem>>, vector<1x128x128xbf16>
      %52 = vector.shape_cast %51 : vector<1x128x128xbf16> to vector<128x128xbf16>
      %53 = vector.shape_cast %47 : vector<128x128xbf16> to vector<1x128x128xbf16>
      tpu.vector_store %arg8[%49, %50, %c0_25], %53 {strides = array<i32>} : memref<2x128x128xbf16, #tpu.memory_space<vmem>>, vector<1x128x128xbf16>,
    } else {
    }
    return
  }
  func.func @transform_1(%arg0: i32, %arg1: i32) -> (i32, i32) {
    %c0_i32 = arith.constant 0 : i32
    %c0_i32_0 = arith.constant 0 : i32
    %c0_i32_1 = arith.constant 0 : i32
    return %c0_i32, %c0_i32_0 : i32, i32
  }
  func.func @transform_2(%arg0: i32, %arg1: i32) -> (i32, i32, i32) {
    %c0_i32 = arith.constant 0 : i32
    %c0_i32_0 = arith.constant 0 : i32
    %c0_i32_1 = arith.constant 0 : i32
    %c0_i32_2 = arith.constant 0 : i32
    return %c0_i32, %c0_i32_0, %c0_i32_1 : i32, i32, i32
  }
  func.func @transform_3(%arg0: i32, %arg1: i32) -> (i32, i32, i32) {
    %c0_i32 = arith.constant 0 : i32
    %c0_i32_0 = arith.constant 0 : i32
    %c0_i32_1 = arith.constant 0 : i32
    return %arg0, %c0_i32, %c0_i32_0 : i32, i32, i32
  }
  func.func @transform_4(%arg0: i32, %arg1: i32) -> (i32, i32, i32) {
    %c0_i32 = arith.constant 0 : i32
    %c0_i32_0 = arith.constant 0 : i32
    %c0_i32_1 = arith.constant 0 : i32
    return %arg0, %c0_i32, %c0_i32_0 : i32, i32, i32
  }
  func.func @transform_5(%arg0: i32, %arg1: i32) -> (i32, i32) {
    %c0_i32 = arith.constant 0 : i32
    %c0_i32_0 = arith.constant 0 : i32
    return %arg1, %c0_i32 : i32, i32
  }
}

</mosaic_0001>

<llo_original>
// kernel: tpu_custom_call.1
$region0: #{tpu_custom_call.1}
  #allocation0 [shape = 'u32[]', space=smem, size = 0x4, offset = 0x4, fixed_abs, tag = 'smem constant byte address 0x4 - core index']
  #allocation1 [shape = 'u32[144,128]{1,0:T(1,128)}', space=vmem, size = 0x12000, scoped, tag = 'internal scratch']
  #allocation2 [shape = 'bf16[2,128,128]{2,1,0:T(8,128)(2,1)}', space=vmem, size = 0x10000, scoped, tag = 'scratch operand']
  #allocation3 [shape = 'bf16[128,128]{1,0:T(8,128)(2,1)}', space=vmem, size = 0x8000, scoped, tag = 'scratch operand']
  #allocation4 [shape = 's32[1]{0}', space=sflag, size = 0x4, scoped, tag = 'scratch operand']
  #allocation12 [shape = 's32[]', space=sflag, size = 0x4, offset = 0, fixed_abs, tag = 'sflag constant byte address 0x0 - dummy sync flag']
  #allocation13 [shape = 's32[]', space=sflag, size = 0x4, offset = 0, fixed_abs, tag = 'sflag constant byte address 0x0 - dummy sync flag']
  #allocation14 [shape = 'u32[]', space=smem, size = 0x4, offset = 0x44, fixed_abs, tag = 'smem constant byte address 0x44 - assertion arg 0']
  #allocation15 [shape = 'u32[]', space=smem, size = 0x4, offset = 0x48, fixed_abs, tag = 'smem constant byte address 0x48 - assertion arg 1']
  %s0 = inlined_call_operand.hbm [shape: bf16[128,128], index: 0, kind: input, shape index: {}]
  %s1 = inlined_call_operand.hbm [shape: bf16[128,128], index: 1, kind: input, shape index: {}]
  %s2 = inlined_call_operand.hbm [shape: bf16[2,128,128], index: 2, kind: input, shape index: {}]
  %s3 = inlined_call_operand.hbm [shape: bf16[2,128,128], index: 3, kind: input, shape index: {}]
  %s4 = inlined_call_operand.vmem [shape: f32[2,1,128], index: 4, kind: input, shape index: {}]
  %s5 = inlined_call_operand.hbm [shape: f32[128,128], index: 5, kind: output, shape index: {}]
  %s6 = sld [smem:[#allocation0]]
  $region73: #{tpu_custom_call.1} parent=0
    _
  %s8 = ssub.s32 1, %s6
  %s9 = scalar_select 0, %s8, %s6
  $region1: #{tpu_custom_call.1} parent=0
    #allocation5 [shape = 'u8[32768]{0}', space=vmem, size = 0x8000, scoped, tag = 'input window, operand 1, single buffered']
    #allocation6 [shape = 's32[2]{0}', space=sflag, size = 0x8, scoped, tag = 'scoped memory for tpu_custom_call.1']
    #allocation7 [shape = 's32[2]{0}', space=sflag, size = 0x8, scoped, tag = 'scoped memory for tpu_custom_call.1']
    #allocation8 [shape = 'u8[32768]{0}', space=vmem, size = 0x8000, scoped, tag = 'input window, operand 2, single buffered']
    #allocation9 [shape = 's32[1]{0}', space=sflag, size = 0x4, scoped, tag = 'scoped memory for tpu_custom_call.1']
    #allocation10 [shape = 'u8[65536]{0}', space=vmem, size = 0x10000, scoped, tag = 'input window, operand 3']
    #allocation11 [shape = 'u8[65536]{0}', space=vmem, size = 0x10000, scoped, tag = 'output window, operand 0, single buffered']
    %10 = vsyncpa [#allocation6], 0
    %11 = vsyncpa [#allocation9], 0
    %12 = vsyncpa [#allocation7], 0
    loop: start=0, step=1, limit=4
    $region2: #{tpu_custom_call.1} parent=1 // loop_pre_header
      _
    $region3: #{tpu_custom_call.1} parent=1 // loop_header
      %s14 = sphi 0, %s18
      %p15 = scmp.ge.s32.totalorder %s14, 4
      %s21 = sphi 0, %s33
      %s22 = sphi 0, %s29
      %s23 = sphi 0, %s21
      %s24 = sphi 0, %s22
      %s25 = sphi 0, %s23
      %s26 = sphi 0, %s24
      %s34 = sphi 0, %s34
      %s36 = sphi 0, %s34
      %s37 = sphi 0, %s36
      %s51 = sphi 0, %s37
      %s55 = sphi 0, %s55
      %s57 = sphi 0, %s55
      %s58 = sphi 0, %s57
      %s72 = sphi 0, %s58
      %s78 = sphi 0, %s80
      %s81 = sphi 0, %s78
      %s82 = sphi 0, %s81
      %s98 = sphi 0, %s82
      %s104 = sphi 0, %s106
      %s107 = sphi 0, %s104
      %s108 = sphi 0, %s107
      %s124 = sphi 0, %s108
      %s130 = sphi 0, %s132
      %s133 = sphi 0, %s130
      %s134 = sphi 0, %s133
      %s150 = sphi 0, %s134
    $region4: #{tpu_custom_call.1} parent=1 // loop_header_branch
      %17 = sbr.rel (%p15) target = $region8
    $region5: #{tpu_custom_call.1} parent=1 // loop_body
      %s19 = ssub.s32 %s14, 1
      %s20 = ssub.s32 %s14, 2
      %s27 = sadd.s32 1, %s22
      %p28 = scmp.ge.s32.totalorder %s27, 1
      %s29 = scalar_select %p28, 0, %s27
      %s30 = sadd.s32 1, %s21
      %s31 = scalar_select %p28, %s30, %s21
      %p32 = scmp.ge.s32.totalorder %s31, 2
      %s33 = scalar_select %p32, 0, %s31
      %s35 = sadd.s32 %s34, 1
      %p38 = scmp.eq.s32.totalorder %s14, 1
      %p39 = scmp.ne.s32.totalorder %s34, %s36
      %p40 = scmp.eq.s32.totalorder %s14, 0
      %p41 = por %p39, %p40
      %p42 = scmp.ne.s32.totalorder %s34, %s36
      %p43 = scmp.eq.s32.totalorder %s19, 1
      %p44 = por %p42, %p43
      %p45 = scmp.ne.s32.totalorder %s36, %s37
      %p46 = scmp.eq.s32.totalorder %s19, 0
      %p47 = por %p45, %p46
      %p48 = scmp.ne.s32.totalorder %s36, %s37
      %p49 = scmp.eq.s32.totalorder %s20, 1
      %p50 = por %p48, %p49
      %p52 = scmp.ne.s32.totalorder %s37, %s51
      %p53 = scmp.eq.s32.totalorder %s20, 0
      %p54 = por %p52, %p53
      %s56 = sadd.s32 %s55, 1
      %p59 = scmp.eq.s32.totalorder %s14, 1
      %p60 = scmp.ne.s32.totalorder %s55, %s57
      %p61 = scmp.eq.s32.totalorder %s14, 0
      %p62 = por %p60, %p61
      %p63 = scmp.ne.s32.totalorder %s55, %s57
      %p64 = scmp.eq.s32.totalorder %s19, 1
      %p65 = por %p63, %p64
      %p66 = scmp.ne.s32.totalorder %s57, %s58
      %p67 = scmp.eq.s32.totalorder %s19, 0
      %p68 = por %p66, %p67
      %p69 = scmp.ne.s32.totalorder %s57, %s58
      %p70 = scmp.eq.s32.totalorder %s20, 1
      %p71 = por %p69, %p70
      %p73 = scmp.ne.s32.totalorder %s58, %s72
      %p74 = scmp.eq.s32.totalorder %s20, 0
      %p75 = por %p73, %p74
      %s76 = ssub.s32 %s21, %s33
      %p77 = scmp.eq.s32.totalorder %s76, 0
      %s79 = sadd.s32 %s78, 1
      %s80 = scalar_select %p77, %s78, %s79
      %p83 = pneg %p77
      %p84 = scmp.eq.s32.totalorder %s14, 1
      %p85 = por %p83, %p84
      %p86 = scmp.ne.s32.totalorder %s78, %s81
      %p87 = scmp.eq.s32.totalorder %s14, 0
      %p88 = por %p86, %p87
      %p89 = scmp.ne.s32.totalorder %s78, %s81
      %p90 = scmp.eq.s32.totalorder %s19, 1
      %p91 = por %p89, %p90
      %p92 = scmp.ne.s32.totalorder %s81, %s82
      %p93 = scmp.eq.s32.totalorder %s19, 0
      %p94 = por %p92, %p93
      %p95 = scmp.ne.s32.totalorder %s81, %s82
      %p96 = scmp.eq.s32.totalorder %s20, 1
      %p97 = por %p95, %p96
      %p99 = scmp.ne.s32.totalorder %s82, %s98
      %p100 = scmp.eq.s32.totalorder %s20, 0
      %p101 = por %p99, %p100
      %s102 = ssub.s32 %s21, %s33
      %p103 = scmp.eq.s32.totalorder %s102, 0
      %s105 = sadd.s32 %s104, 1
      %s106 = scalar_select %p103, %s104, %s105
      %p109 = pneg %p103
      %p110 = scmp.eq.s32.totalorder %s14, 1
      %p111 = por %p109, %p110
      %p112 = scmp.ne.s32.totalorder %s104, %s107
      %p113 = scmp.eq.s32.totalorder %s14, 0
      %p114 = por %p112, %p113
      %p115 = scmp.ne.s32.totalorder %s104, %s107
      %p116 = scmp.eq.s32.totalorder %s19, 1
      %p117 = por %p115, %p116
      %p118 = scmp.ne.s32.totalorder %s107, %s108
      %p119 = scmp.eq.s32.totalorder %s19, 0
      %p120 = por %p118, %p119
      %p121 = scmp.ne.s32.totalorder %s107, %s108
      %p122 = scmp.eq.s32.totalorder %s20, 1
      %p123 = por %p121, %p122
      %p125 = scmp.ne.s32.totalorder %s108, %s124
      %p126 = scmp.eq.s32.totalorder %s20, 0
      %p127 = por %p125, %p126
      %s128 = ssub.s32 %s22, %s29
      %p129 = scmp.eq.s32.totalorder %s128, 0
      %s131 = sadd.s32 %s130, 1
      %s132 = scalar_select %p129, %s130, %s131
      %p135 = pneg %p129
      %p136 = scmp.eq.s32.totalorder %s14, 1
      %p137 = por %p135, %p136
      %p138 = scmp.ne.s32.totalorder %s130, %s133
      %p139 = scmp.eq.s32.totalorder %s14, 0
      %p140 = por %p138, %p139
      %p141 = scmp.ne.s32.totalorder %s130, %s133
      %p142 = scmp.eq.s32.totalorder %s19, 1
      %p143 = por %p141, %p142
      %p144 = scmp.ne.s32.totalorder %s133, %s134
      %p145 = scmp.eq.s32.totalorder %s19, 0
      %p146 = por %p144, %p145
      %p147 = scmp.ne.s32.totalorder %s133, %s134
      %p148 = scmp.eq.s32.totalorder %s20, 1
      %p149 = por %p147, %p148
      %p151 = scmp.ne.s32.totalorder %s134, %s150
      %p152 = scmp.eq.s32.totalorder %s20, 0
      %p153 = por %p151, %p152
      %p154 = scmp.le.s32.totalorder 1, %s14
      %p155 = scmp.lt.s32.totalorder %s14, 3
      %p156 = pnand %p154, %p155
      %p157 = pneg %p156
      // Predicated region
      $region9: #{tpu_custom_call.1} parent=5 // pred_check
        _
      $region10: #{tpu_custom_call.1} parent=5 // pred_check_branch
        %159 = sbr.rel (%p156) target = $region12
      $region11: #{tpu_custom_call.1} parent=5 // pred_region
        %s160 = ssub.s32 %s14, 1
        // Predicated region
        $region13: #{tpu_custom_call.1} parent=11 // pred_check
          %p161 = pneg %p47
        $region14: #{tpu_custom_call.1} parent=11 // pred_check_branch
          %163 = sbr.rel (%p161) target = $region16
        $region15: #{tpu_custom_call.1} parent=11 // pred_region
          %s165 = ssub.s32 1024, 1024
          %166 = vsyncadd [#allocation6], %s165
          %s167 = sshll.u32 [#allocation5], 4
          %s168 = int_to_ptr.vmem [resolvable:$true] %s167
          %173 = dma.hbm_to_vmem [thread:$0]  %s1, 1024, %s168, [#allocation6], 64, 64, 4
        $region16: #{tpu_custom_call.1} parent=11 // pred_fallthru
          _
        // Predicated region
        $region17: #{tpu_custom_call.1} parent=11 // pred_check
          %p174 = pneg %p68
        $region18: #{tpu_custom_call.1} parent=11 // pred_check_branch
          %176 = sbr.rel (%p174) target = $region20
        $region19: #{tpu_custom_call.1} parent=11 // pred_region
          %s178 = ssub.s32 1024, 1024
          %179 = vsyncadd [#allocation9], %s178
          %s180 = sshll.u32 [#allocation8], 4
          %s181 = int_to_ptr.vmem [resolvable:$true] %s180
          %186 = dma.hbm_to_vmem [thread:$0]  %s2, 1024, %s181, [#allocation9], 64, 64, 4
        $region20: #{tpu_custom_call.1} parent=11 // pred_fallthru
          _
      $region12: #{tpu_custom_call.1} parent=5 // pred_fallthru
        _
      %p187 = scmp.lt.s32.totalorder %s14, 2
      // Predicated region
      $region21: #{tpu_custom_call.1} parent=5 // pred_check
        %p188 = pneg %p187
      $region22: #{tpu_custom_call.1} parent=5 // pred_check_branch
        %190 = sbr.rel (%p188) target = $region24
      $region23: #{tpu_custom_call.1} parent=5 // pred_region
        // Predicated region
        $region25: #{tpu_custom_call.1} parent=23 // pred_check
          %p191 = pneg %p88
        $region26: #{tpu_custom_call.1} parent=23 // pred_check_branch
          %193 = sbr.rel (%p191) target = $region28
        $region27: #{tpu_custom_call.1} parent=23 // pred_region
          %s194 = sand.u32 %s14, 1
          %s195 = scalar_lea.sflag [#allocation6], %s194
          %s196 = sand.u32 %s78, 1
          %s197 = smul.addr %s196, 64
          %s198 = scalar_lea.vmem [#allocation10], %s197
          %s200 = ssub.s32 1024, 1024
          %201 = vsyncadd %s195, %s200
          %s202 = smul.addr %s21, 16
          %s203 = smul.addr %s202, 64
          %s204 = scalar_lea.hbm %s3, %s203
          %s205 = sshll.u32 %s198, 4
          %s206 = int_to_ptr.vmem [resolvable:$true] %s205
          %211 = dma.hbm_to_vmem [thread:$0]  %s204, 1024, %s206, %s195, 64, 64, 4
        $region28: #{tpu_custom_call.1} parent=23 // pred_fallthru
          _
        // Predicated region
        $region29: #{tpu_custom_call.1} parent=23 // pred_check
          %p212 = pneg %p114
        $region30: #{tpu_custom_call.1} parent=23 // pred_check_branch
          %214 = sbr.rel (%p212) target = $region32
        $region31: #{tpu_custom_call.1} parent=23 // pred_region
          %p215 = scmp.lt.s32.totalorder %s21, 1
          %s216 = scalar_select %p215, %s21, 1
          %s217 = scalar_lea.vmem %s4, %s216
        $region32: #{tpu_custom_call.1} parent=23 // pred_fallthru
          _
      $region24: #{tpu_custom_call.1} parent=5 // pred_fallthru
        _
      %p218 = scmp.le.s32.totalorder 1, %s14
      %p219 = scmp.lt.s32.totalorder %s14, 3
      %p220 = pnand %p218, %p219
      %p221 = pneg %p220
      // Predicated region
      $region33: #{tpu_custom_call.1} parent=5 // pred_check
        _
      $region34: #{tpu_custom_call.1} parent=5 // pred_check_branch
        %223 = sbr.rel (%p220) target = $region36
      $region35: #{tpu_custom_call.1} parent=5 // pred_region
        %s224 = ssub.s32 %s14, 1
        // Predicated region
        $region37: #{tpu_custom_call.1} parent=35 // pred_check
          %p225 = pneg %p47
        $region38: #{tpu_custom_call.1} parent=35 // pred_check_branch
          %227 = sbr.rel (%p225) target = $region40
        $region39: #{tpu_custom_call.1} parent=35 // pred_region
          %228 = dma.done [#allocation6], 1024
        $region40: #{tpu_custom_call.1} parent=35 // pred_fallthru
          _
        // Predicated region
        $region41: #{tpu_custom_call.1} parent=35 // pred_check
          %p229 = pneg %p68
        $region42: #{tpu_custom_call.1} parent=35 // pred_check_branch
          %231 = sbr.rel (%p229) target = $region44
        $region43: #{tpu_custom_call.1} parent=35 // pred_region
          %232 = dma.done [#allocation9], 1024
        $region44: #{tpu_custom_call.1} parent=35 // pred_fallthru
          _
        %s233 = sand.u32 %s19, 1
        %s234 = scalar_lea.sflag [#allocation6], %s233
        %s235 = sand.u32 %s81, 1
        %s236 = smul.addr %s235, 64
        %s237 = scalar_lea.vmem [#allocation10], %s236
        // Predicated region
        $region45: #{tpu_custom_call.1} parent=35 // pred_check
          %p238 = pneg %p94
        $region46: #{tpu_custom_call.1} parent=35 // pred_check_branch
          %240 = sbr.rel (%p238) target = $region48
        $region47: #{tpu_custom_call.1} parent=35 // pred_region
          %241 = dma.done %s234, 1024
        $region48: #{tpu_custom_call.1} parent=35 // pred_fallthru
          _
        %p242 = pneg %p47
        %p243 = pneg %p44
        %p244 = pneg %p68
        %p245 = pneg %p65
        %s246 = sand.u32 %s19, 1
        %s247 = scalar_lea.sflag [#allocation6], %s246
        %s248 = sand.u32 %s81, 1
        %s249 = smul.addr %s248, 64
        %s250 = scalar_lea.vmem [#allocation10], %s249
        %p251 = pneg %p94
        %p252 = pneg %p91
        %p253 = scmp.lt.s32.totalorder %s23, 1
        %s254 = scalar_select %p253, %s23, 1
        %s255 = scalar_lea.vmem %s4, %s254
        %p256 = pneg %p120
        %p257 = pneg %p117
        %p258 = pneg %p146
        %p259 = pneg %p143
        %p260 = scmp.lt.s32.totalorder %s23, 1
        %s261 = scalar_select %p260, %s23, 1
        %s262 = scalar_lea.vmem %s4, %s261
        %s263 = smul.u32 16, %s24
        %p265 = scmp.eq.s32.totalorder %s23, 0
        %p266 = scmp.eq.s32.totalorder %s24, 0
        %p267 = pnand %p265, %p266
        %p268 = pneg %p267
        // Predicated region
        $region49: #{tpu_custom_call.1} parent=35 // pred_check
          _
        $region50: #{tpu_custom_call.1} parent=35 // pred_check_branch
          %270 = sbr.rel (%p267) target = $region52
        $region51: #{tpu_custom_call.1} parent=35 // pred_region
          // Predicated region
          $region53: #{tpu_custom_call.1} parent=51 // pred_check
            _
          $region54: #{tpu_custom_call.1} parent=51 // pred_check_branch
            %272 = sbr.rel target = $region56
          $region55: #{tpu_custom_call.1} parent=51 // pred_region
            %273 = sst [smem:[#allocation14]] [#allocation13]
            %274 = sst [smem:[#allocation15]] [#allocation12]
          $region56: #{tpu_custom_call.1} parent=51 // pred_fallthru
            _
          %276 = shalt.err (0)
          %s278 = sshll.u32 [#allocation3], 4
          %s279 = int_to_ptr.vmem [resolvable:$true] %s278
          %281 = dma.hbm_to_vmem [thread:$0]  %s0, 1024, %s279, [#allocation4]
          %v282 = vld [vmem:[#allocation5] sm:$0xf]
          %v283 = vld [vmem:[#allocation5 + $0x4] sm:$0xf]
          %v284 = vld [vmem:[#allocation5 + $0x8] sm:$0xf]
          %v285 = vld [vmem:[#allocation5 + $0xc] sm:$0xf]
          %v286 = vld [vmem:[#allocation5 + $0x10] sm:$0xf]
          %v287 = vld [vmem:[#allocation5 + $0x14] sm:$0xf]
          %v288 = vld [vmem:[#allocation5 + $0x18] sm:$0xf]
          %v289 = vld [vmem:[#allocation5 + $0x1c] sm:$0xf]
          %v290 = vld [vmem:[#allocation5 + $0x20] sm:$0xf]
          %v291 = vld [vmem:[#allocation5 + $0x24] sm:$0xf]
          %v292 = vld [vmem:[#allocation5 + $0x28] sm:$0xf]
          %v293 = vld [vmem:[#allocation5 + $0x2c] sm:$0xf]
          %v294 = vld [vmem:[#allocation5 + $0x30] sm:$0xf]
          %v295 = vld [vmem:[#allocation5 + $0x34] sm:$0xf]
          %v296 = vld [vmem:[#allocation5 + $0x38] sm:$0xf]
          %v297 = vld [vmem:[#allocation5 + $0x3c] sm:$0xf]
          %v298 = vld [vmem:[#allocation8] sm:$0xf]
          %v299 = vld [vmem:[#allocation8 + $0x4] sm:$0xf]
          %v300 = vld [vmem:[#allocation8 + $0x8] sm:$0xf]
          %v301 = vld [vmem:[#allocation8 + $0xc] sm:$0xf]
          %v302 = vld [vmem:[#allocation8 + $0x10] sm:$0xf]
          %v303 = vld [vmem:[#allocation8 + $0x14] sm:$0xf]
          %v304 = vld [vmem:[#allocation8 + $0x18] sm:$0xf]
          %v305 = vld [vmem:[#allocation8 + $0x1c] sm:$0xf]
          %v306 = vld [vmem:[#allocation8 + $0x20] sm:$0xf]
          %v307 = vld [vmem:[#allocation8 + $0x24] sm:$0xf]
          %v308 = vld [vmem:[#allocation8 + $0x28] sm:$0xf]
          %v309 = vld [vmem:[#allocation8 + $0x2c] sm:$0xf]
          %v310 = vld [vmem:[#allocation8 + $0x30] sm:$0xf]
          %v311 = vld [vmem:[#allocation8 + $0x34] sm:$0xf]
          %v312 = vld [vmem:[#allocation8 + $0x38] sm:$0xf]
          %v313 = vld [vmem:[#allocation8 + $0x3c] sm:$0xf]
          %v330 = vunpack.c.l.b16 %v282
          %v331 = vunpack.c.l.b16 %v283
          %v332 = vunpack.c.l.b16 %v284
          %v333 = vunpack.c.l.b16 %v285
          %v334 = vunpack.c.l.b16 %v286
          %v335 = vunpack.c.l.b16 %v287
          %v336 = vunpack.c.l.b16 %v288
          %v337 = vunpack.c.l.b16 %v289
          %v338 = vunpack.c.l.b16 %v290
          %v339 = vunpack.c.l.b16 %v291
          %v340 = vunpack.c.l.b16 %v292
          %v341 = vunpack.c.l.b16 %v293
          %v342 = vunpack.c.l.b16 %v294
          %v343 = vunpack.c.l.b16 %v295
          %v344 = vunpack.c.l.b16 %v296
          %v345 = vunpack.c.l.b16 %v297
          %v346 = vpack.c.b16 %v331, %v330
          %v347 = vpack.c.b16 %v333, %v332
          %v348 = vpack.c.b16 %v335, %v334
          %v349 = vpack.c.b16 %v337, %v336
          %v350 = vpack.c.b16 %v339, %v338
          %v351 = vpack.c.b16 %v341, %v340
          %v352 = vpack.c.b16 %v343, %v342
          %v353 = vpack.c.b16 %v345, %v344
          %v378 = vunpack.c.l.b16 %v298
          %v379 = vunpack.c.l.b16 %v299
          %v380 = vunpack.c.l.b16 %v300
          %v381 = vunpack.c.l.b16 %v301
          %v382 = vunpack.c.l.b16 %v302
          %v383 = vunpack.c.l.b16 %v303
          %v384 = vunpack.c.l.b16 %v304
          %v385 = vunpack.c.l.b16 %v305
          %v386 = vunpack.c.l.b16 %v306
          %v387 = vunpack.c.l.b16 %v307
          %v388 = vunpack.c.l.b16 %v308
          %v389 = vunpack.c.l.b16 %v309
          %v390 = vunpack.c.l.b16 %v310
          %v391 = vunpack.c.l.b16 %v311
          %v392 = vunpack.c.l.b16 %v312
          %v393 = vunpack.c.l.b16 %v313
          %v394 = vpack.c.b16 %v379, %v378
          %v395 = vpack.c.b16 %v381, %v380
          %v396 = vpack.c.b16 %v383, %v382
          %v397 = vpack.c.b16 %v385, %v384
          %v398 = vpack.c.b16 %v387, %v386
          %v399 = vpack.c.b16 %v389, %v388
          %v400 = vpack.c.b16 %v391, %v390
          %v401 = vpack.c.b16 %v393, %v392
          %410 = vmatprep.subr.bf16.mxu0 0
          %411 = vmatpush1.bf16.msra.mxu0 %v401
          %412 = vmatprep.subr.bf16.mxu0 0
          %413 = vmatpush1.bf16.msra.mxu0 %v400
          %414 = vmatprep.subr.bf16.mxu0 0
          %415 = vmatpush1.bf16.msra.mxu0 %v399
          %416 = vmatprep.subr.bf16.mxu0 0
          %417 = vmatpush1.bf16.msra.mxu0 %v398
          %418 = vmatprep.subr.bf16.mxu0 0
          %419 = vmatpush1.bf16.msra.mxu0 %v397
          %420 = vmatprep.subr.bf16.mxu0 0
          %421 = vmatpush1.bf16.msra.mxu0 %v396
          %422 = vmatprep.subr.bf16.mxu0 0
          %423 = vmatpush1.bf16.msra.mxu0 %v395
          %424 = vmatprep.subr.bf16.mxu0 0
          %425 = vmatpush1.bf16.msra.mxu0 %v394
          %426 = vmatprep.subr.bf16.mxu0 0
          %427 = vmatpush2.bf16.msra.mxu0 0
          %428 = vmatprep.subr.bf16.mxu0 0
          %429 = vmatpush2.bf16.msra.mxu0 0
          %430 = vmatprep.subr.bf16.mxu0 0
          %431 = vmatpush2.bf16.msra.mxu0 0
          %432 = vmatprep.subr.bf16.mxu0 0
          %433 = vmatpush2.bf16.msra.mxu0 0
          %434 = vmatprep.subr.bf16.mxu0 0
          %435 = vmatpush2.bf16.msra.mxu0 0
          %436 = vmatprep.subr.bf16.mxu0 0
          %437 = vmatpush2.bf16.msra.mxu0 0
          %438 = vmatprep.subr.bf16.mxu0 0
          %439 = vmatpush2.bf16.msra.mxu0 0
          %440 = vmatprep.subr.bf16.mxu0 0
          %441 = vmatpush2.bf16.msra.mxu0 0
          %442 = vmatprep.mubr.bf16.mxu0 0
          %443 = vmatmul.mubr.bf16.gmra.mxu0 %v346
          %v444 = vpop.f32.mrf.mxu0
          %v445 = vadd.f32 0.0, %v444
          %v446 = vpop.f32.mrf.mxu0
          %v447 = vpop.f32.mrf.mxu0
          %v448 = vadd.f32 0.0, %v447
          %v449 = vpop.f32.mrf.mxu0
          %450 = vmatprep.mubr.bf16.mxu0 0
          %451 = vmatmul.mubr.bf16.gmra.mxu0 %v347
          %v452 = vpop.f32.mrf.mxu0
          %v453 = vadd.f32 0.0, %v452
          %v454 = vpop.f32.mrf.mxu0
          %v455 = vpop.f32.mrf.mxu0
          %v456 = vadd.f32 0.0, %v455
          %v457 = vpop.f32.mrf.mxu0
          %458 = vmatprep.mubr.bf16.mxu0 0
          %459 = vmatmul.mubr.bf16.gmra.mxu0 %v348
          %v460 = vpop.f32.mrf.mxu0
          %v461 = vadd.f32 0.0, %v460
          %v462 = vpop.f32.mrf.mxu0
          %v463 = vpop.f32.mrf.mxu0
          %v464 = vadd.f32 0.0, %v463
          %v465 = vpop.f32.mrf.mxu0
          %466 = vmatprep.mubr.bf16.mxu0 0
          %467 = vmatmul.mubr.bf16.gmra.mxu0 %v349
          %v468 = vpop.f32.mrf.mxu0
          %v469 = vadd.f32 0.0, %v468
          %v470 = vpop.f32.mrf.mxu0
          %v471 = vpop.f32.mrf.mxu0
          %v472 = vadd.f32 0.0, %v471
          %v473 = vpop.f32.mrf.mxu0
          %474 = vmatprep.mubr.bf16.mxu0 0
          %475 = vmatmul.mubr.bf16.gmra.mxu0 %v350
          %v476 = vpop.f32.mrf.mxu0
          %v477 = vadd.f32 0.0, %v476
          %v478 = vpop.f32.mrf.mxu0
          %v479 = vpop.f32.mrf.mxu0
          %v480 = vadd.f32 0.0, %v479
          %v481 = vpop.f32.mrf.mxu0
          %482 = vmatprep.mubr.bf16.mxu0 0
          %483 = vmatmul.mubr.bf16.gmra.mxu0 %v351
          %v484 = vpop.f32.mrf.mxu0
          %v485 = vadd.f32 0.0, %v484
          %v486 = vpop.f32.mrf.mxu0
          %v487 = vpop.f32.mrf.mxu0
          %v488 = vadd.f32 0.0, %v487
          %v489 = vpop.f32.mrf.mxu0
          %490 = vmatprep.mubr.bf16.mxu0 0
          %491 = vmatmul.mubr.bf16.gmra.mxu0 %v352
          %v492 = vpop.f32.mrf.mxu0
          %v493 = vadd.f32 0.0, %v492
          %v494 = vpop.f32.mrf.mxu0
          %v495 = vpop.f32.mrf.mxu0
          %v496 = vadd.f32 0.0, %v495
          %v497 = vpop.f32.mrf.mxu0
          %498 = vmatprep.mubr.bf16.mxu0 0
          %499 = vmatmul.mubr.bf16.gmra.mxu0 %v353
          %v500 = vpop.f32.mrf.mxu0
          %v501 = vadd.f32 0.0, %v500
          %v502 = vpop.f32.mrf.mxu0
          %v503 = vpop.f32.mrf.mxu0
          %v504 = vadd.f32 0.0, %v503
          %v505 = vpop.f32.mrf.mxu0
          %506 = vdwg.mxu0
          %v507 = vpack.c.bf16 %v448, %v445
          %v508 = vpack.c.bf16 %v456, %v453
          %v509 = vpack.c.bf16 %v464, %v461
          %v510 = vpack.c.bf16 %v472, %v469
          %v511 = vpack.c.bf16 %v480, %v477
          %v512 = vpack.c.bf16 %v488, %v485
          %v513 = vpack.c.bf16 %v496, %v493
          %v514 = vpack.c.bf16 %v504, %v501
          %v523 = vunpack.c.l.b16 %v507
          %v524 = vunpack.c.h.b16 %v507
          %v525 = vunpack.c.l.b16 %v508
          %v526 = vunpack.c.h.b16 %v508
          %v527 = vunpack.c.l.b16 %v509
          %v528 = vunpack.c.h.b16 %v509
          %v529 = vunpack.c.l.b16 %v510
          %v530 = vunpack.c.h.b16 %v510
          %v531 = vunpack.c.l.b16 %v511
          %v532 = vunpack.c.h.b16 %v511
          %v533 = vunpack.c.l.b16 %v512
          %v534 = vunpack.c.h.b16 %v512
          %v535 = vunpack.c.l.b16 %v513
          %v536 = vunpack.c.h.b16 %v513
          %v537 = vunpack.c.l.b16 %v514
          %v538 = vunpack.c.h.b16 %v514
          %v539 = vpack.c.b16 %v523, %v523
          %v540 = vpack.c.b16 %v524, %v524
          %v541 = vpack.c.b16 %v525, %v525
          %v542 = vpack.c.b16 %v526, %v526
          %v543 = vpack.c.b16 %v527, %v527
          %v544 = vpack.c.b16 %v528, %v528
          %v545 = vpack.c.b16 %v529, %v529
          %v546 = vpack.c.b16 %v530, %v530
          %v547 = vpack.c.b16 %v531, %v531
          %v548 = vpack.c.b16 %v532, %v532
          %v549 = vpack.c.b16 %v533, %v533
          %v550 = vpack.c.b16 %v534, %v534
          %v551 = vpack.c.b16 %v535, %v535
          %v552 = vpack.c.b16 %v536, %v536
          %v553 = vpack.c.b16 %v537, %v537
          %v554 = vpack.c.b16 %v538, %v538
          %571 = vst [vmem:[#allocation2] sm:$0xf] %v539
          %572 = vst [vmem:[#allocation2 + $0x4] sm:$0xf] %v540
          %573 = vst [vmem:[#allocation2 + $0x8] sm:$0xf] %v541
          %574 = vst [vmem:[#allocation2 + $0xc] sm:$0xf] %v542
          %575 = vst [vmem:[#allocation2 + $0x10] sm:$0xf] %v543
          %576 = vst [vmem:[#allocation2 + $0x14] sm:$0xf] %v544
          %577 = vst [vmem:[#allocation2 + $0x18] sm:$0xf] %v545
          %578 = vst [vmem:[#allocation2 + $0x1c] sm:$0xf] %v546
          %579 = vst [vmem:[#allocation2 + $0x20] sm:$0xf] %v547
          %580 = vst [vmem:[#allocation2 + $0x24] sm:$0xf] %v548
          %581 = vst [vmem:[#allocation2 + $0x28] sm:$0xf] %v549
          %582 = vst [vmem:[#allocation2 + $0x2c] sm:$0xf] %v550
          %583 = vst [vmem:[#allocation2 + $0x30] sm:$0xf] %v551
          %584 = vst [vmem:[#allocation2 + $0x34] sm:$0xf] %v552
          %585 = vst [vmem:[#allocation2 + $0x38] sm:$0xf] %v553
          %586 = vst [vmem:[#allocation2 + $0x3c] sm:$0xf] %v554
          %s587 = smul.u32 4, 16
          %s588 = smul.u32 %s587, 1
          %s589 = sshll.u32 %s588, 4
          %590 = dma.done [#allocation4], %s589
        $region52: #{tpu_custom_call.1} parent=35 // pred_fallthru
          _
        %s591 = smul.u32 %s24, 128
        %p592 = scmp.lt.s32.totalorder %s23, 0
        %s593 = ssub.s32 0, %s23
        %s594 = scalar_select %p592, %s593, %s23
        %s595 = sand.u32 %s594, 1
        %s596 = ssub.s32 0, %s595
        %s597 = scalar_select %p592, %s596, %s595
        %p598 = scmp.ne.s32.totalorder %s597, 0
        %p599 = scmp.lt.s32.totalorder %s597, 0
        %p600 = pnand %p599, %p598
        %p601 = pneg %p600
        %s602 = sadd.s32 %s597, 2
        %s603 = scalar_select %p601, %s602, %s597
        %s604 = sshra.s32 %s591, 3
        %s605 = sand.u32 %s591, 7
        %s606 = smul.addr %s604, 4
        %s607 = scalar_lea.vmem [#allocation3], %s606
        %v608 = vld [vmem:[%s607] sm:$0xf]
        %v609 = vld [vmem:[%s607 + $0x4] sm:$0xf]
        %v610 = vld [vmem:[%s607 + $0x8] sm:$0xf]
        %v611 = vld [vmem:[%s607 + $0xc] sm:$0xf]
        %v612 = vld [vmem:[%s607 + $0x10] sm:$0xf]
        %v613 = vld [vmem:[%s607 + $0x14] sm:$0xf]
        %v614 = vld [vmem:[%s607 + $0x18] sm:$0xf]
        %v615 = vld [vmem:[%s607 + $0x1c] sm:$0xf]
        %v616 = vld [vmem:[%s607 + $0x20] sm:$0xf]
        %v617 = vld [vmem:[%s607 + $0x24] sm:$0xf]
        %v618 = vld [vmem:[%s607 + $0x28] sm:$0xf]
        %v619 = vld [vmem:[%s607 + $0x2c] sm:$0xf]
        %v620 = vld [vmem:[%s607 + $0x30] sm:$0xf]
        %v621 = vld [vmem:[%s607 + $0x34] sm:$0xf]
        %v622 = vld [vmem:[%s607 + $0x38] sm:$0xf]
        %v623 = vld [vmem:[%s607 + $0x3c] sm:$0xf]
        %s624 = smul.u32 %s603, 16
        %s625 = smul.addr %s624, 4
        %s626 = scalar_lea.vmem [#allocation2], %s625
        %v627 = vld [vmem:[%s626] sm:$0xf]
        %v628 = vld [vmem:[%s626 + $0x4] sm:$0xf]
        %v629 = vld [vmem:[%s626 + $0x8] sm:$0xf]
        %v630 = vld [vmem:[%s626 + $0xc] sm:$0xf]
        %v631 = vld [vmem:[%s626 + $0x10] sm:$0xf]
        %v632 = vld [vmem:[%s626 + $0x14] sm:$0xf]
        %v633 = vld [vmem:[%s626 + $0x18] sm:$0xf]
        %v634 = vld [vmem:[%s626 + $0x1c] sm:$0xf]
        %v635 = vld [vmem:[%s626 + $0x20] sm:$0xf]
        %v636 = vld [vmem:[%s626 + $0x24] sm:$0xf]
        %v637 = vld [vmem:[%s626 + $0x28] sm:$0xf]
        %v638 = vld [vmem:[%s626 + $0x2c] sm:$0xf]
        %v639 = vld [vmem:[%s626 + $0x30] sm:$0xf]
        %v640 = vld [vmem:[%s626 + $0x34] sm:$0xf]
        %v641 = vld [vmem:[%s626 + $0x38] sm:$0xf]
        %v642 = vld [vmem:[%s626 + $0x3c] sm:$0xf]
        %v643 = vld [vmem:[%s262] sm:$0x1]
        %v645 = vlaneseq
        %v646 = vshrl.u32 %v645, 7
        %v647 = vsub.s32 0, %v646
        %v648 = vrot.slane %v643, %v647
        %v666 = vunpack.c.l.b16 %v608
        %v667 = vunpack.c.l.b16 %v609
        %v668 = vunpack.c.l.b16 %v610
        %v669 = vunpack.c.l.b16 %v611
        %v670 = vunpack.c.l.b16 %v612
        %v671 = vunpack.c.l.b16 %v613
        %v672 = vunpack.c.l.b16 %v614
        %v673 = vunpack.c.l.b16 %v615
        %v674 = vunpack.c.l.b16 %v616
        %v675 = vunpack.c.l.b16 %v617
        %v676 = vunpack.c.l.b16 %v618
        %v677 = vunpack.c.l.b16 %v619
        %v678 = vunpack.c.l.b16 %v620
        %v679 = vunpack.c.l.b16 %v621
        %v680 = vunpack.c.l.b16 %v622
        %v681 = vunpack.c.l.b16 %v623
        %v682 = vpack.c.b16 %v667, %v666
        %v683 = vpack.c.b16 %v669, %v668
        %v684 = vpack.c.b16 %v671, %v670
        %v685 = vpack.c.b16 %v673, %v672
        %v686 = vpack.c.b16 %v675, %v674
        %v687 = vpack.c.b16 %v677, %v676
        %v688 = vpack.c.b16 %v679, %v678
        %v689 = vpack.c.b16 %v681, %v680
        %v714 = vunpack.c.l.b16 %v627
        %v715 = vunpack.c.l.b16 %v628
        %v716 = vunpack.c.l.b16 %v629
        %v717 = vunpack.c.l.b16 %v630
        %v718 = vunpack.c.l.b16 %v631
        %v719 = vunpack.c.l.b16 %v632
        %v720 = vunpack.c.l.b16 %v633
        %v721 = vunpack.c.l.b16 %v634
        %v722 = vunpack.c.l.b16 %v635
        %v723 = vunpack.c.l.b16 %v636
        %v724 = vunpack.c.l.b16 %v637
        %v725 = vunpack.c.l.b16 %v638
        %v726 = vunpack.c.l.b16 %v639
        %v727 = vunpack.c.l.b16 %v640
        %v728 = vunpack.c.l.b16 %v641
        %v729 = vunpack.c.l.b16 %v642
        %v730 = vpack.c.b16 %v715, %v714
        %v731 = vpack.c.b16 %v717, %v716
        %v732 = vpack.c.b16 %v719, %v718
        %v733 = vpack.c.b16 %v721, %v720
        %v734 = vpack.c.b16 %v723, %v722
        %v735 = vpack.c.b16 %v725, %v724
        %v736 = vpack.c.b16 %v727, %v726
        %v737 = vpack.c.b16 %v729, %v728
        %746 = vmatprep.subr.bf16.mxu0 0
        %747 = vmatpush1.bf16.msra.mxu0 %v737
        %748 = vmatprep.subr.bf16.mxu0 0
        %749 = vmatpush1.bf16.msra.mxu0 %v736
        %750 = vmatprep.subr.bf16.mxu0 0
        %751 = vmatpush1.bf16.msra.mxu0 %v735
        %752 = vmatprep.subr.bf16.mxu0 0
        %753 = vmatpush1.bf16.msra.mxu0 %v734
        %754 = vmatprep.subr.bf16.mxu0 0
        %755 = vmatpush1.bf16.msra.mxu0 %v733
        %756 = vmatprep.subr.bf16.mxu0 0
        %757 = vmatpush1.bf16.msra.mxu0 %v732
        %758 = vmatprep.subr.bf16.mxu0 0
        %759 = vmatpush1.bf16.msra.mxu0 %v731
        %760 = vmatprep.subr.bf16.mxu0 0
        %761 = vmatpush1.bf16.msra.mxu0 %v730
        %762 = vmatprep.subr.bf16.mxu0 0
        %763 = vmatpush2.bf16.msra.mxu0 0
        %764 = vmatprep.subr.bf16.mxu0 0
        %765 = vmatpush2.bf16.msra.mxu0 0
        %766 = vmatprep.subr.bf16.mxu0 0
        %767 = vmatpush2.bf16.msra.mxu0 0
        %768 = vmatprep.subr.bf16.mxu0 0
        %769 = vmatpush2.bf16.msra.mxu0 0
        %770 = vmatprep.subr.bf16.mxu0 0
        %771 = vmatpush2.bf16.msra.mxu0 0
        %772 = vmatprep.subr.bf16.mxu0 0
        %773 = vmatpush2.bf16.msra.mxu0 0
        %774 = vmatprep.subr.bf16.mxu0 0
        %775 = vmatpush2.bf16.msra.mxu0 0
        %776 = vmatprep.subr.bf16.mxu0 0
        %777 = vmatpush2.bf16.msra.mxu0 0
        %778 = vmatprep.mubr.bf16.mxu0 0
        %779 = vmatmul.mubr.bf16.gmra.mxu0 %v682
        %v780 = vpop.f32.mrf.mxu0
        %v781 = vadd.f32 %v648, %v780
        %v782 = vpop.f32.mrf.mxu0
        %v783 = vpop.f32.mrf.mxu0
        %v784 = vadd.f32 %v648, %v783
        %v785 = vpop.f32.mrf.mxu0
        %786 = vmatprep.mubr.bf16.mxu0 0
        %787 = vmatmul.mubr.bf16.gmra.mxu0 %v683
        %v788 = vpop.f32.mrf.mxu0
        %v789 = vadd.f32 %v648, %v788
        %v790 = vpop.f32.mrf.mxu0
        %v791 = vpop.f32.mrf.mxu0
        %v792 = vadd.f32 %v648, %v791
        %v793 = vpop.f32.mrf.mxu0
        %794 = vmatprep.mubr.bf16.mxu0 0
        %795 = vmatmul.mubr.bf16.gmra.mxu0 %v684
        %v796 = vpop.f32.mrf.mxu0
        %v797 = vadd.f32 %v648, %v796
        %v798 = vpop.f32.mrf.mxu0
        %v799 = vpop.f32.mrf.mxu0
        %v800 = vadd.f32 %v648, %v799
        %v801 = vpop.f32.mrf.mxu0
        %802 = vmatprep.mubr.bf16.mxu0 0
        %803 = vmatmul.mubr.bf16.gmra.mxu0 %v685
        %v804 = vpop.f32.mrf.mxu0
        %v805 = vadd.f32 %v648, %v804
        %v806 = vpop.f32.mrf.mxu0
        %v807 = vpop.f32.mrf.mxu0
        %v808 = vadd.f32 %v648, %v807
        %v809 = vpop.f32.mrf.mxu0
        %810 = vmatprep.mubr.bf16.mxu0 0
        %811 = vmatmul.mubr.bf16.gmra.mxu0 %v686
        %v812 = vpop.f32.mrf.mxu0
        %v813 = vadd.f32 %v648, %v812
        %v814 = vpop.f32.mrf.mxu0
        %v815 = vpop.f32.mrf.mxu0
        %v816 = vadd.f32 %v648, %v815
        %v817 = vpop.f32.mrf.mxu0
        %818 = vmatprep.mubr.bf16.mxu0 0
        %819 = vmatmul.mubr.bf16.gmra.mxu0 %v687
        %v820 = vpop.f32.mrf.mxu0
        %v821 = vadd.f32 %v648, %v820
        %v822 = vpop.f32.mrf.mxu0
        %v823 = vpop.f32.mrf.mxu0
        %v824 = vadd.f32 %v648, %v823
        %v825 = vpop.f32.mrf.mxu0
        %826 = vmatprep.mubr.bf16.mxu0 0
        %827 = vmatmul.mubr.bf16.gmra.mxu0 %v688
        %v828 = vpop.f32.mrf.mxu0
        %v829 = vadd.f32 %v648, %v828
        %v830 = vpop.f32.mrf.mxu0
        %v831 = vpop.f32.mrf.mxu0
        %v832 = vadd.f32 %v648, %v831
        %v833 = vpop.f32.mrf.mxu0
        %834 = vmatprep.mubr.bf16.mxu0 0
        %835 = vmatmul.mubr.bf16.gmra.mxu0 %v689
        %v836 = vpop.f32.mrf.mxu0
        %v837 = vadd.f32 %v648, %v836
        %v838 = vpop.f32.mrf.mxu0
        %v839 = vpop.f32.mrf.mxu0
        %v840 = vadd.f32 %v648, %v839
        %v841 = vpop.f32.mrf.mxu0
        %842 = vdwg.mxu0
        %vm843 = vcmp.gt.f32.partialorder %v781, 0.0
        %vm844 = vcmp.gt.f32.partialorder %v784, 0.0
        %vm845 = vcmp.gt.f32.partialorder %v789, 0.0
        %vm846 = vcmp.gt.f32.partialorder %v792, 0.0
        %vm847 = vcmp.gt.f32.partialorder %v797, 0.0
        %vm848 = vcmp.gt.f32.partialorder %v800, 0.0
        %vm849 = vcmp.gt.f32.partialorder %v805, 0.0
        %vm850 = vcmp.gt.f32.partialorder %v808, 0.0
        %vm851 = vcmp.gt.f32.partialorder %v813, 0.0
        %vm852 = vcmp.gt.f32.partialorder %v816, 0.0
        %vm853 = vcmp.gt.f32.partialorder %v821, 0.0
        %vm854 = vcmp.gt.f32.partialorder %v824, 0.0
        %vm855 = vcmp.gt.f32.partialorder %v829, 0.0
        %vm856 = vcmp.gt.f32.partialorder %v832, 0.0
        %vm857 = vcmp.gt.f32.partialorder %v837, 0.0
        %vm858 = vcmp.gt.f32.partialorder %v840, 0.0
        %v859 = vmin.f32 %v781, 0.0
        %v860 = vmin.f32 %v784, 0.0
        %v861 = vmin.f32 %v789, 0.0
        %v862 = vmin.f32 %v792, 0.0
        %v863 = vmin.f32 %v797, 0.0
        %v864 = vmin.f32 %v800, 0.0
        %v865 = vmin.f32 %v805, 0.0
        %v866 = vmin.f32 %v808, 0.0
        %v867 = vmin.f32 %v813, 0.0
        %v868 = vmin.f32 %v816, 0.0
        %v869 = vmin.f32 %v821, 0.0
        %v870 = vmin.f32 %v824, 0.0
        %v871 = vmin.f32 %v829, 0.0
        %v872 = vmin.f32 %v832, 0.0
        %v873 = vmin.f32 %v837, 0.0
        %v874 = vmin.f32 %v840, 0.0
        %v875 = vmul.f32 %v859, 1.442695
        %v876 = vpow.pop %v875
        %v877 = vmul.f32 %v860, 1.442695
        %v878 = vpow.pop %v877
        %v879 = vmul.f32 %v861, 1.442695
        %v880 = vpow.pop %v879
        %v881 = vmul.f32 %v862, 1.442695
        %v882 = vpow.pop %v881
        %v883 = vmul.f32 %v863, 1.442695
        %v884 = vpow.pop %v883
        %v885 = vmul.f32 %v864, 1.442695
        %v886 = vpow.pop %v885
        %v887 = vmul.f32 %v865, 1.442695
        %v888 = vpow.pop %v887
        %v889 = vmul.f32 %v866, 1.442695
        %v890 = vpow.pop %v889
        %v891 = vmul.f32 %v867, 1.442695
        %v892 = vpow.pop %v891
        %v893 = vmul.f32 %v868, 1.442695
        %v894 = vpow.pop %v893
        %v895 = vmul.f32 %v869, 1.442695
        %v896 = vpow.pop %v895
        %v897 = vmul.f32 %v870, 1.442695
        %v898 = vpow.pop %v897
        %v899 = vmul.f32 %v871, 1.442695
        %v900 = vpow.pop %v899
        %v901 = vmul.f32 %v872, 1.442695
        %v902 = vpow.pop %v901
        %v903 = vmul.f32 %v873, 1.442695
        %v904 = vpow.pop %v903
        %v905 = vmul.f32 %v874, 1.442695
        %v906 = vpow.pop %v905
        %v907 = vsub.f32 %v876, 1.0
        %v908 = vsub.f32 %v878, 1.0
        %v909 = vsub.f32 %v880, 1.0
        %v910 = vsub.f32 %v882, 1.0
        %v911 = vsub.f32 %v884, 1.0
        %v912 = vsub.f32 %v886, 1.0
        %v913 = vsub.f32 %v888, 1.0
        %v914 = vsub.f32 %v890, 1.0
        %v915 = vsub.f32 %v892, 1.0
        %v916 = vsub.f32 %v894, 1.0
        %v917 = vsub.f32 %v896, 1.0
        %v918 = vsub.f32 %v898, 1.0
        %v919 = vsub.f32 %v900, 1.0
        %v920 = vsub.f32 %v902, 1.0
        %v921 = vsub.f32 %v904, 1.0
        %v922 = vsub.f32 %v906, 1.0
        %v923 = vsel %vm843, %v781, %v907
        %v924 = vsel %vm844, %v784, %v908
        %v925 = vsel %vm845, %v789, %v909
        %v926 = vsel %vm846, %v792, %v910
        %v927 = vsel %vm847, %v797, %v911
        %v928 = vsel %vm848, %v800, %v912
        %v929 = vsel %vm849, %v805, %v913
        %v930 = vsel %vm850, %v808, %v914
        %v931 = vsel %vm851, %v813, %v915
        %v932 = vsel %vm852, %v816, %v916
        %v933 = vsel %vm853, %v821, %v917
        %v934 = vsel %vm854, %v824, %v918
        %v935 = vsel %vm855, %v829, %v919
        %v936 = vsel %vm856, %v832, %v920
        %v937 = vsel %vm857, %v837, %v921
        %v938 = vsel %vm858, %v840, %v922
        %939 = vst [vmem:[#allocation11] sm:$0xff] %v923
        %940 = vst [vmem:[#allocation11 + $0x8] sm:$0xff] %v924
        %941 = vst [vmem:[#allocation11 + $0x10] sm:$0xff] %v925
        %942 = vst [vmem:[#allocation11 + $0x18] sm:$0xff] %v926
        %943 = vst [vmem:[#allocation11 + $0x20] sm:$0xff] %v927
        %944 = vst [vmem:[#allocation11 + $0x28] sm:$0xff] %v928
        %945 = vst [vmem:[#allocation11 + $0x30] sm:$0xff] %v929
        %946 = vst [vmem:[#allocation11 + $0x38] sm:$0xff] %v930
        %947 = vst [vmem:[#allocation11 + $0x40] sm:$0xff] %v931
        %948 = vst [vmem:[#allocation11 + $0x48] sm:$0xff] %v932
        %949 = vst [vmem:[#allocation11 + $0x50] sm:$0xff] %v933
        %950 = vst [vmem:[#allocation11 + $0x58] sm:$0xff] %v934
        %951 = vst [vmem:[#allocation11 + $0x60] sm:$0xff] %v935
        %952 = vst [vmem:[#allocation11 + $0x68] sm:$0xff] %v936
        %953 = vst [vmem:[#allocation11 + $0x70] sm:$0xff] %v937
        %954 = vst [vmem:[#allocation11 + $0x78] sm:$0xff] %v938
        %p955 = scmp.ne.s32.totalorder %s23, 1
        // Predicated region
        $region57: #{tpu_custom_call.1} parent=35 // pred_check
          %p956 = pneg %p955
        $region58: #{tpu_custom_call.1} parent=35 // pred_check_branch
          %958 = sbr.rel (%p956) target = $region60
        $region59: #{tpu_custom_call.1} parent=35 // pred_region
          %v959 = vpack.c.bf16 %v924, %v923
          %v960 = vpack.c.bf16 %v926, %v925
          %v961 = vpack.c.bf16 %v928, %v927
          %v962 = vpack.c.bf16 %v930, %v929
          %v963 = vpack.c.bf16 %v932, %v931
          %v964 = vpack.c.bf16 %v934, %v933
          %v965 = vpack.c.bf16 %v936, %v935
          %v966 = vpack.c.bf16 %v938, %v937
          %v967 = vld [vmem:[%s237] sm:$0xf]
          %v968 = vld [vmem:[%s237 + $0x4] sm:$0xf]
          %v969 = vld [vmem:[%s237 + $0x8] sm:$0xf]
          %v970 = vld [vmem:[%s237 + $0xc] sm:$0xf]
          %v971 = vld [vmem:[%s237 + $0x10] sm:$0xf]
          %v972 = vld [vmem:[%s237 + $0x14] sm:$0xf]
          %v973 = vld [vmem:[%s237 + $0x18] sm:$0xf]
          %v974 = vld [vmem:[%s237 + $0x1c] sm:$0xf]
          %v975 = vld [vmem:[%s237 + $0x20] sm:$0xf]
          %v976 = vld [vmem:[%s237 + $0x24] sm:$0xf]
          %v977 = vld [vmem:[%s237 + $0x28] sm:$0xf]
          %v978 = vld [vmem:[%s237 + $0x2c] sm:$0xf]
          %v979 = vld [vmem:[%s237 + $0x30] sm:$0xf]
          %v980 = vld [vmem:[%s237 + $0x34] sm:$0xf]
          %v981 = vld [vmem:[%s237 + $0x38] sm:$0xf]
          %v982 = vld [vmem:[%s237 + $0x3c] sm:$0xf]
          %v999 = vunpack.c.l.b16 %v967
          %v1000 = vunpack.c.l.b16 %v968
          %v1001 = vunpack.c.l.b16 %v969
          %v1002 = vunpack.c.l.b16 %v970
          %v1003 = vunpack.c.l.b16 %v971
          %v1004 = vunpack.c.l.b16 %v972
          %v1005 = vunpack.c.l.b16 %v973
          %v1006 = vunpack.c.l.b16 %v974
          %v1007 = vunpack.c.l.b16 %v975
          %v1008 = vunpack.c.l.b16 %v976
          %v1009 = vunpack.c.l.b16 %v977
          %v1010 = vunpack.c.l.b16 %v978
          %v1011 = vunpack.c.l.b16 %v979
          %v1012 = vunpack.c.l.b16 %v980
          %v1013 = vunpack.c.l.b16 %v981
          %v1014 = vunpack.c.l.b16 %v982
          %v1015 = vpack.c.b16 %v1000, %v999
          %v1016 = vpack.c.b16 %v1002, %v1001
          %v1017 = vpack.c.b16 %v1004, %v1003
          %v1018 = vpack.c.b16 %v1006, %v1005
          %v1019 = vpack.c.b16 %v1008, %v1007
          %v1020 = vpack.c.b16 %v1010, %v1009
          %v1021 = vpack.c.b16 %v1012, %v1011
          %v1022 = vpack.c.b16 %v1014, %v1013
          %1031 = vmatprep.subr.bf16.mxu0 0
          %1032 = vmatpush1.bf16.msra.mxu0 %v1022
          %1033 = vmatprep.subr.bf16.mxu0 0
          %1034 = vmatpush1.bf16.msra.mxu0 %v1021
          %1035 = vmatprep.subr.bf16.mxu0 0
          %1036 = vmatpush1.bf16.msra.mxu0 %v1020
          %1037 = vmatprep.subr.bf16.mxu0 0
          %1038 = vmatpush1.bf16.msra.mxu0 %v1019
          %1039 = vmatprep.subr.bf16.mxu0 0
          %1040 = vmatpush1.bf16.msra.mxu0 %v1018
          %1041 = vmatprep.subr.bf16.mxu0 0
          %1042 = vmatpush1.bf16.msra.mxu0 %v1017
          %1043 = vmatprep.subr.bf16.mxu0 0
          %1044 = vmatpush1.bf16.msra.mxu0 %v1016
          %1045 = vmatprep.subr.bf16.mxu0 0
          %1046 = vmatpush1.bf16.msra.mxu0 %v1015
          %1047 = vmatprep.subr.bf16.mxu0 0
          %1048 = vmatpush2.bf16.msra.mxu0 0
          %1049 = vmatprep.subr.bf16.mxu0 0
          %1050 = vmatpush2.bf16.msra.mxu0 0
          %1051 = vmatprep.subr.bf16.mxu0 0
          %1052 = vmatpush2.bf16.msra.mxu0 0
          %1053 = vmatprep.subr.bf16.mxu0 0
          %1054 = vmatpush2.bf16.msra.mxu0 0
          %1055 = vmatprep.subr.bf16.mxu0 0
          %1056 = vmatpush2.bf16.msra.mxu0 0
          %1057 = vmatprep.subr.bf16.mxu0 0
          %1058 = vmatpush2.bf16.msra.mxu0 0
          %1059 = vmatprep.subr.bf16.mxu0 0
          %1060 = vmatpush2.bf16.msra.mxu0 0
          %1061 = vmatprep.subr.bf16.mxu0 0
          %1062 = vmatpush2.bf16.msra.mxu0 0
          %1063 = vmatprep.mubr.bf16.mxu0 0
          %1064 = vmatmul.mubr.bf16.gmra.mxu0 %v959
          %v1065 = vpop.f32.mrf.mxu0
          %v1066 = vadd.f32 0.0, %v1065
          %v1067 = vpop.f32.mrf.mxu0
          %v1068 = vpop.f32.mrf.mxu0
          %v1069 = vadd.f32 0.0, %v1068
          %v1070 = vpop.f32.mrf.mxu0
          %1071 = vmatprep.mubr.bf16.mxu0 0
          %1072 = vmatmul.mubr.bf16.gmra.mxu0 %v960
          %v1073 = vpop.f32.mrf.mxu0
          %v1074 = vadd.f32 0.0, %v1073
          %v1075 = vpop.f32.mrf.mxu0
          %v1076 = vpop.f32.mrf.mxu0
          %v1077 = vadd.f32 0.0, %v1076
          %v1078 = vpop.f32.mrf.mxu0
          %1079 = vmatprep.mubr.bf16.mxu0 0
          %1080 = vmatmul.mubr.bf16.gmra.mxu0 %v961
          %v1081 = vpop.f32.mrf.mxu0
          %v1082 = vadd.f32 0.0, %v1081
          %v1083 = vpop.f32.mrf.mxu0
          %v1084 = vpop.f32.mrf.mxu0
          %v1085 = vadd.f32 0.0, %v1084
          %v1086 = vpop.f32.mrf.mxu0
          %1087 = vmatprep.mubr.bf16.mxu0 0
          %1088 = vmatmul.mubr.bf16.gmra.mxu0 %v962
          %v1089 = vpop.f32.mrf.mxu0
          %v1090 = vadd.f32 0.0, %v1089
          %v1091 = vpop.f32.mrf.mxu0
          %v1092 = vpop.f32.mrf.mxu0
          %v1093 = vadd.f32 0.0, %v1092
          %v1094 = vpop.f32.mrf.mxu0
          %1095 = vmatprep.mubr.bf16.mxu0 0
          %1096 = vmatmul.mubr.bf16.gmra.mxu0 %v963
          %v1097 = vpop.f32.mrf.mxu0
          %v1098 = vadd.f32 0.0, %v1097
          %v1099 = vpop.f32.mrf.mxu0
          %v1100 = vpop.f32.mrf.mxu0
          %v1101 = vadd.f32 0.0, %v1100
          %v1102 = vpop.f32.mrf.mxu0
          %1103 = vmatprep.mubr.bf16.mxu0 0
          %1104 = vmatmul.mubr.bf16.gmra.mxu0 %v964
          %v1105 = vpop.f32.mrf.mxu0
          %v1106 = vadd.f32 0.0, %v1105
          %v1107 = vpop.f32.mrf.mxu0
          %v1108 = vpop.f32.mrf.mxu0
          %v1109 = vadd.f32 0.0, %v1108
          %v1110 = vpop.f32.mrf.mxu0
          %1111 = vmatprep.mubr.bf16.mxu0 0
          %1112 = vmatmul.mubr.bf16.gmra.mxu0 %v965
          %v1113 = vpop.f32.mrf.mxu0
          %v1114 = vadd.f32 0.0, %v1113
          %v1115 = vpop.f32.mrf.mxu0
          %v1116 = vpop.f32.mrf.mxu0
          %v1117 = vadd.f32 0.0, %v1116
          %v1118 = vpop.f32.mrf.mxu0
          %1119 = vmatprep.mubr.bf16.mxu0 0
          %1120 = vmatmul.mubr.bf16.gmra.mxu0 %v966
          %v1121 = vpop.f32.mrf.mxu0
          %v1122 = vadd.f32 0.0, %v1121
          %v1123 = vpop.f32.mrf.mxu0
          %v1124 = vpop.f32.mrf.mxu0
          %v1125 = vadd.f32 0.0, %v1124
          %v1126 = vpop.f32.mrf.mxu0
          %1127 = vdwg.mxu0
          %v1128 = vpack.c.bf16 %v1069, %v1066
          %v1129 = vpack.c.bf16 %v1077, %v1074
          %v1130 = vpack.c.bf16 %v1085, %v1082
          %v1131 = vpack.c.bf16 %v1093, %v1090
          %v1132 = vpack.c.bf16 %v1101, %v1098
          %v1133 = vpack.c.bf16 %v1109, %v1106
          %v1134 = vpack.c.bf16 %v1117, %v1114
          %v1135 = vpack.c.bf16 %v1125, %v1122
          %s1136 = ssub.s32 1, %s603
          %v1145 = vunpack.c.l.b16 %v1128
          %v1146 = vunpack.c.h.b16 %v1128
          %v1147 = vunpack.c.l.b16 %v1129
          %v1148 = vunpack.c.h.b16 %v1129
          %v1149 = vunpack.c.l.b16 %v1130
          %v1150 = vunpack.c.h.b16 %v1130
          %v1151 = vunpack.c.l.b16 %v1131
          %v1152 = vunpack.c.h.b16 %v1131
          %v1153 = vunpack.c.l.b16 %v1132
          %v1154 = vunpack.c.h.b16 %v1132
          %v1155 = vunpack.c.l.b16 %v1133
          %v1156 = vunpack.c.h.b16 %v1133
          %v1157 = vunpack.c.l.b16 %v1134
          %v1158 = vunpack.c.h.b16 %v1134
          %v1159 = vunpack.c.l.b16 %v1135
          %v1160 = vunpack.c.h.b16 %v1135
          %v1161 = vpack.c.b16 %v1145, %v1145
          %v1162 = vpack.c.b16 %v1146, %v1146
          %v1163 = vpack.c.b16 %v1147, %v1147
          %v1164 = vpack.c.b16 %v1148, %v1148
          %v1165 = vpack.c.b16 %v1149, %v1149
          %v1166 = vpack.c.b16 %v1150, %v1150
          %v1167 = vpack.c.b16 %v1151, %v1151
          %v1168 = vpack.c.b16 %v1152, %v1152
          %v1169 = vpack.c.b16 %v1153, %v1153
          %v1170 = vpack.c.b16 %v1154, %v1154
          %v1171 = vpack.c.b16 %v1155, %v1155
          %v1172 = vpack.c.b16 %v1156, %v1156
          %v1173 = vpack.c.b16 %v1157, %v1157
          %v1174 = vpack.c.b16 %v1158, %v1158
          %v1175 = vpack.c.b16 %v1159, %v1159
          %v1176 = vpack.c.b16 %v1160, %v1160
          %s1193 = smul.u32 %s1136, 16
          %s1194 = sadd.s32 %s604, %s1193
          %s1195 = smul.addr %s1194, 4
          %s1196 = scalar_lea.vmem [#allocation2], %s1195
          %1197 = vst [vmem:[%s1196] sm:$0xf] %v1161
          %1198 = vst [vmem:[%s1196 + $0x4] sm:$0xf] %v1162
          %1199 = vst [vmem:[%s1196 + $0x8] sm:$0xf] %v1163
          %1200 = vst [vmem:[%s1196 + $0xc] sm:$0xf] %v1164
          %1201 = vst [vmem:[%s1196 + $0x10] sm:$0xf] %v1165
          %1202 = vst [vmem:[%s1196 + $0x14] sm:$0xf] %v1166
          %1203 = vst [vmem:[%s1196 + $0x18] sm:$0xf] %v1167
          %1204 = vst [vmem:[%s1196 + $0x1c] sm:$0xf] %v1168
          %1205 = vst [vmem:[%s1196 + $0x20] sm:$0xf] %v1169
          %1206 = vst [vmem:[%s1196 + $0x24] sm:$0xf] %v1170
          %1207 = vst [vmem:[%s1196 + $0x28] sm:$0xf] %v1171
          %1208 = vst [vmem:[%s1196 + $0x2c] sm:$0xf] %v1172
          %1209 = vst [vmem:[%s1196 + $0x30] sm:$0xf] %v1173
          %1210 = vst [vmem:[%s1196 + $0x34] sm:$0xf] %v1174
          %1211 = vst [vmem:[%s1196 + $0x38] sm:$0xf] %v1175
          %1212 = vst [vmem:[%s1196 + $0x3c] sm:$0xf] %v1176
        $region60: #{tpu_custom_call.1} parent=35 // pred_fallthru
          _
        // Predicated region
        $region61: #{tpu_custom_call.1} parent=35 // pred_check
          %p1213 = pneg %p143
        $region62: #{tpu_custom_call.1} parent=35 // pred_check_branch
          %1215 = sbr.rel (%p1213) target = $region64
        $region63: #{tpu_custom_call.1} parent=35 // pred_region
          %s1216 = smul.u32 16, %s24
          %s1218 = ssub.s32 2048, 2048
          %1219 = vsyncadd [#allocation7], %s1218
          %s1220 = smul.addr %s1216, 128
          %s1221 = scalar_lea.hbm %s5, %s1220
          %s1222 = sshll.u32 [#allocation11], 4
          %s1223 = int_to_ptr.vmem [resolvable:$true] %s1222
          %1228 = dma.vmem_to_hbm [thread:$0]  %s1223, 2048, %s1221, [#allocation7], 128, 128, 8
        $region64: #{tpu_custom_call.1} parent=35 // pred_fallthru
          _
        // Predicated region
        $region65: #{tpu_custom_call.1} parent=35 // pred_check
          %p1229 = pneg %p143
        $region66: #{tpu_custom_call.1} parent=35 // pred_check_branch
          %1231 = sbr.rel (%p1229) target = $region68
        $region67: #{tpu_custom_call.1} parent=35 // pred_region
          %1232 = dma.done [#allocation7], 2048
        $region68: #{tpu_custom_call.1} parent=35 // pred_fallthru
          _
      $region36: #{tpu_custom_call.1} parent=5 // pred_fallthru
        _
      %p1233 = scmp.le.s32.totalorder 2, %s14
      // Predicated region
      $region69: #{tpu_custom_call.1} parent=5 // pred_check
        %p1234 = pneg %p1233
      $region70: #{tpu_custom_call.1} parent=5 // pred_check_branch
        %1236 = sbr.rel (%p1234) target = $region72
      $region71: #{tpu_custom_call.1} parent=5 // pred_region
        %s1237 = ssub.s32 %s14, 2
      $region72: #{tpu_custom_call.1} parent=5 // pred_fallthru
        _
    $region6: #{tpu_custom_call.1} parent=1 // loop_footer
      %s18 = sadd.s32 1, %s14
    $region7: #{tpu_custom_call.1} parent=1 // loop_footer_branch
      %13 = sbr.rel target = $region3
    $region8: #{tpu_custom_call.1} parent=1 // loop_exit
      _
    %1238 = vsyncpa [#allocation6], 1
    %s1239 = scalar_lea.sflag [#allocation6], 1
    %1240 = vsyncpa %s1239, 1
    %1241 = vsyncpa [#allocation9], 1
    %1242 = vsyncpa [#allocation7], 1
    %s1243 = scalar_lea.sflag [#allocation7], 1
    %1244 = vsyncpa %s1243, 1
  %1245 = vsyncmov [#allocation4]
  %s1246 = vpop.sfrf %1245
  %p1247 = scmp.eq.s32.totalorder %s1246, 0
  %p1248 = pneg %p1247
  %1250 = shalt.err (%p1248)

</llo_original>
